<compile_context>
chip_gen: v5e
topology: v5e:2x2
jax: 0.10.0
libtpu: 0.0.40
codegen_flags: <defaults>
</compile_context>

<pallas_src>
import jax
import jax.numpy as jnp
from jax.experimental import pallas as pl
from jax.experimental.pallas import tpu as pltpu

LANES = 128
MAIN_CHUNK = 8 * LANES      # kernel region is a multiple of one (8,128) tile
MAX_TILE_ROWS = 1024        # 1024 x 128 f32 = 512 KiB per input block
NCORES = 2                  # v7x has 2 TensorCores; harmless elsewhere


def _make_kernel(rows, tile_rows, blocks_per_core):
    """Builds a kernel computing per-core partial sums of (x - t)^2."""
    assert tile_rows % 8 == 0

    def kernel(x_ref, t_ref, part_ref):
        c = pl.program_id(0)   # core (parallel) axis
        i = pl.program_id(1)   # reduction (arbitrary) axis

        @pl.when(i == 0)
        def _():
            part_ref[...] = jnp.zeros_like(part_ref)

        d = x_ref[...].astype(jnp.float32) - t_ref[...].astype(jnp.float32)
        sq = d * d

        # Mask rows past the end of the (rows, 128) view.  Handles both the
        # ragged final block and phantom (clamped) blocks on the second core.
        global_block = c * blocks_per_core + i
        row_ids = global_block * tile_rows + jax.lax.broadcasted_iota(
            jnp.int32, (tile_rows, LANES), 0)
        sq = jnp.where(row_ids < rows, sq, 0.0)

        # Fold (tile_rows, 128) -> (8, 128) with vreg-wise adds only; the one
        # cross-lane reduce happens outside the kernel, once.
        folded = sq.reshape(tile_rows // 8, 8, LANES).sum(axis=0)
        part_ref[...] += folded.reshape(1, 8, LANES)

    return kernel


def content_loss_forward(x, target, weight):
    """Returns (input_passthrough, loss) with loss = mse(x, target) * weight."""
    assert x.shape == target.shape
    n = x.size

    flat_x = x.reshape(-1)
    flat_t = target.reshape(-1)

    # Main region: multiple of one (8,128) tile so all block shapes are legal
    # without any pad copies.  Tail (< 1024 elems) handled in plain JAX.
    n_main = (n // MAIN_CHUNK) * MAIN_CHUNK
    rem = n - n_main

    if rem:
        dt = flat_x[n_main:].astype(jnp.float32) - flat_t[n_main:].astype(jnp.float32)
        tail_sum = jnp.sum(dt * dt)
    else:
        tail_sum = jnp.float32(0.0)

    if n_main:
        rows = n_main // LANES
        x2 = flat_x[:n_main].reshape(rows, LANES)   # free reshape when rem == 0
        t2 = flat_t[:n_main].reshape(rows, LANES)

        tile_rows = MAX_TILE_ROWS if rows >= MAX_TILE_ROWS else rows
        total_blocks = pl.cdiv(rows, tile_rows)
        ncores = min(NCORES, total_blocks)
        blocks_per_core = pl.cdiv(total_blocks, ncores)
        last_block = total_blocks - 1

        if ncores * blocks_per_core == total_blocks:
            def in_map(c, i):
                return (c * blocks_per_core + i, 0)
        else:
            def in_map(c, i):
                # Clamp phantom grid points into range; their contribution is
                # masked to zero inside the kernel.
                return (jnp.minimum(c * blocks_per_core + i, last_block), 0)

        partials = pl.pallas_call(
            _make_kernel(rows, tile_rows, blocks_per_core),
            out_shape=jax.ShapeDtypeStruct((ncores, 8, LANES), jnp.float32),
            grid=(ncores, blocks_per_core),
            in_specs=[
                pl.BlockSpec((tile_rows, LANES), in_map),
                pl.BlockSpec((tile_rows, LANES), in_map),
            ],
            out_specs=pl.BlockSpec((1, 8, LANES), lambda c, i: (c, 0, 0)),
            compiler_params=pltpu.CompilerParams(
                dimension_semantics=("parallel", "arbitrary")),
        )(x2, t2)
        main_sum = jnp.sum(partials)
    else:
        main_sum = jnp.float32(0.0)

    loss = (main_sum + tail_sum) * jnp.float32(float(weight) / n)
    # Pass-through: forward() returns the input unchanged (no kernel echo, no
    # extra HBM write pass).
    return x, loss


if __name__ == "__main__":
    root = jax.random.PRNGKey(0)

    def run_case(subkey, shape, weight, rtol=1e-5):
        kx, kt = jax.random.split(subkey)
        x = jax.random.normal(kx, shape, dtype=jnp.float32)
        t = jax.random.normal(kt, shape, dtype=jnp.float32)
        out, loss = content_loss_forward(x, t, weight)
        out = jax.block_until_ready(out)
        loss = jax.block_until_ready(loss)
        ref = jnp.mean((x - t) ** 2) * weight
        assert jnp.allclose(out, x), ("pass-through mismatch", shape)
        assert jnp.allclose(loss, ref, rtol=rtol, atol=1e-5), (shape, loss, ref)

    k0, k1, k2 = jax.random.split(root, 3)
    # canonical small NCHW feature map
    run_case(k0, (2, 4, 16, 16), 1000.0)
    # total size not lane-aligned -> exercises the plain-JAX tail path
    run_case(k1, (3, 5, 7, 11), 10.0)
    # multi-block case -> exercises 2-core split, ragged + phantom block masking
    run_case(k2, (2, 16, 96, 96), 1.0, rtol=1e-4)

    print("KERNEL_OK")
</pallas_src>

<mosaic_0001>
module attributes {stable_mosaic.version = 11 : i64} {
  func.func @kernel(%arg0: i32, %arg1: i32, %arg2: memref<16x128xf32, #tpu.memory_space<vmem>>, %arg3: memref<16x128xf32, #tpu.memory_space<vmem>>, %arg4: memref<1x8x128xf32, #tpu.memory_space<vmem>>) attributes {dimension_semantics = [#tpu.dimension_semantics<parallel>, #tpu.dimension_semantics<arbitrary>], iteration_bounds = array<i64: 1, 1>, scalar_prefetch = 0 : i64, scratch_operands = 0 : i64, tpu.core_type = #tpu.core_type<tc>, window_params = [{transform_indices = @transform_0, window_bounds = array<i64: 16, 128>}, {transform_indices = @transform_1, window_bounds = array<i64: 16, 128>}, {transform_indices = @transform_2, window_bounds = array<i64: 1, 8, 128>}]} {
    %c0_i32 = arith.constant 0 : i32
    %0 = arith.cmpi eq, %arg1, %c0_i32 : i32
    %1 = arith.extui %0 : i1 to i32
    %c0_i32_0 = arith.constant 0 : i32
    %2 = arith.cmpi ne, %1, %c0_i32_0 : i32
    scf.if %2 {
      %cst_12 = arith.constant 0.000000e+00 : f32
      %23 = vector.broadcast %cst_12 : f32 to vector<1x8x128xf32>
      %c0_13 = arith.constant 0 : index
      %c0_14 = arith.constant 0 : index
      %c0_15 = arith.constant 0 : index
      %24 = vector.load %arg4[%c0_13, %c0_14, %c0_15] : memref<1x8x128xf32, #tpu.memory_space<vmem>>, vector<1x8x128xf32>
      tpu.vector_store %arg4[%c0_13, %c0_14, %c0_15], %23 {strides = array<i32>} : memref<1x8x128xf32, #tpu.memory_space<vmem>>, vector<1x8x128xf32>,
    } else {
    }
    %c0 = arith.constant 0 : index
    %c0_1 = arith.constant 0 : index
    %3 = vector.load %arg2[%c0, %c0_1] : memref<16x128xf32, #tpu.memory_space<vmem>>, vector<16x128xf32>
    %c0_2 = arith.constant 0 : index
    %c0_3 = arith.constant 0 : index
    %4 = vector.load %arg3[%c0_2, %c0_3] : memref<16x128xf32, #tpu.memory_space<vmem>>, vector<16x128xf32>
    %5 = arith.subf %3, %4 : vector<16x128xf32>
    %6 = arith.mulf %5, %5 : vector<16x128xf32>
    %c1_i32 = arith.constant 1 : i32
    %7 = arith.muli %arg0, %c1_i32 : i32
    %8 = arith.addi %7, %arg1 : i32
    %c16_i32 = arith.constant 16 : i32
    %9 = arith.muli %8, %c16_i32 : i32
    %10 = tpu.iota {dimensions = array<i32: 0>} : vector<16x128xi32>
    %11 = vector.broadcast %9 : i32 to vector<16x128xi32>
    %12 = arith.addi %11, %10 : vector<16x128xi32>
    %c16_i32_4 = arith.constant 16 : i32
    %13 = vector.broadcast %c16_i32_4 : i32 to vector<16x128xi32>
    %14 = arith.cmpi slt, %12, %13 : vector<16x128xi32>
    %cst = arith.constant 0.000000e+00 : f32
    %15 = vector.broadcast %cst : f32 to vector<16x128xf32>
    %16 = arith.select %14, %6, %15 : vector<16x128xi1>, vector<16x128xf32>
    %17 = vector.shape_cast %16 : vector<16x128xf32> to vector<2x8x128xf32>
    %cst_5 = arith.constant dense<0.000000e+00> : vector<8x128xf32>
    %18 = vector.multi_reduction <add>, %17, %cst_5 [0] : vector<2x8x128xf32> to vector<8x128xf32>
    %c0_6 = arith.constant 0 : index
    %c0_7 = arith.constant 0 : index
    %c0_8 = arith.constant 0 : index
    %19 = vector.load %arg4[%c0_6, %c0_7, %c0_8] : memref<1x8x128xf32, #tpu.memory_space<vmem>>, vector<1x8x128xf32>
    %20 = vector.shape_cast %18 : vector<8x128xf32> to vector<1x8x128xf32>
    %21 = arith.addf %19, %20 : vector<1x8x128xf32>
    %c0_9 = arith.constant 0 : index
    %c0_10 = arith.constant 0 : index
    %c0_11 = arith.constant 0 : index
    %22 = vector.load %arg4[%c0_9, %c0_10, %c0_11] : memref<1x8x128xf32, #tpu.memory_space<vmem>>, vector<1x8x128xf32>
    tpu.vector_store %arg4[%c0_9, %c0_10, %c0_11], %21 {strides = array<i32>} : memref<1x8x128xf32, #tpu.memory_space<vmem>>, vector<1x8x128xf32>,
    return
  }
  func.func @transform_0(%arg0: i32, %arg1: i32) -> (i32, i32) {
    %c1_i32 = arith.constant 1 : i32
    %0 = arith.muli %arg0, %c1_i32 : i32
    %1 = arith.addi %0, %arg1 : i32
    %c0_i32 = arith.constant 0 : i32
    %c0_i32_0 = arith.constant 0 : i32
    return %1, %c0_i32 : i32, i32
  }
  func.func @transform_1(%arg0: i32, %arg1: i32) -> (i32, i32) {
    %c1_i32 = arith.constant 1 : i32
    %0 = arith.muli %arg0, %c1_i32 : i32
    %1 = arith.addi %0, %arg1 : i32
    %c0_i32 = arith.constant 0 : i32
    %c0_i32_0 = arith.constant 0 : i32
    return %1, %c0_i32 : i32, i32
  }
  func.func @transform_2(%arg0: i32, %arg1: i32) -> (i32, i32, i32) {
    %c0_i32 = arith.constant 0 : i32
    %c0_i32_0 = arith.constant 0 : i32
    %c0_i32_1 = arith.constant 0 : i32
    return %arg0, %c0_i32, %c0_i32_0 : i32, i32, i32
  }
}

</mosaic_0001>

<llo_original>
// kernel: tpu_custom_call.1
$region0: #{tpu_custom_call.1}
  #allocation0 [shape = 'u32[]', space=smem, size = 0x4, offset = 0x4, fixed_abs, tag = 'smem constant byte address 0x4 - core index']
  #allocation1 [shape = 'u32[72,128]{1,0:T(1,128)}', space=vmem, size = 0x9000, scoped, tag = 'internal scratch']
  %s0 = inlined_call_operand.hbm [shape: f32[16,128], index: 0, kind: input, shape index: {}]
  %s1 = inlined_call_operand.hbm [shape: f32[16,128], index: 1, kind: input, shape index: {}]
  %s2 = inlined_call_operand.hbm [shape: f32[1,8,128], index: 2, kind: output, shape index: {}]
  %s3 = sld [smem:[#allocation0]]
  $region30: #{tpu_custom_call.1} parent=0
    _
  %s5 = ssub.s32 1, %s3
  %s6 = scalar_select 0, %s5, %s3
  $region1: #{tpu_custom_call.1} parent=0
    #allocation2 [shape = 'u8[8192]{0}', space=vmem, size = 0x2000, scoped, tag = 'input window, operand 0, single buffered']
    #allocation3 [shape = 's32[1]{0}', space=sflag, size = 0x4, scoped, tag = 'scoped memory for tpu_custom_call.1']
    #allocation4 [shape = 's32[1]{0}', space=sflag, size = 0x4, scoped, tag = 'scoped memory for tpu_custom_call.1']
    #allocation5 [shape = 'u8[8192]{0}', space=vmem, size = 0x2000, scoped, tag = 'input window, operand 1, single buffered']
    #allocation6 [shape = 's32[1]{0}', space=sflag, size = 0x4, scoped, tag = 'scoped memory for tpu_custom_call.1']
    #allocation7 [shape = 'u8[4096]{0}', space=vmem, size = 0x1000, scoped, tag = 'output window, operand 0, single buffered']
    %7 = vsyncpa [#allocation3], 0
    %8 = vsyncpa [#allocation6], 0
    %9 = vsyncpa [#allocation4], 0
    // Predicated region
    $region2: #{tpu_custom_call.1} parent=1 // pred_check
      _
    $region3: #{tpu_custom_call.1} parent=1 // pred_check_branch
      %11 = sbr.rel (0) target = $region5
    $region4: #{tpu_custom_call.1} parent=1 // pred_region
      %s12 = sadd.s32 0, 0
      %s13 = smul.u32 2, %s12
      %15 = vsyncadd [#allocation3], 0
      %s16 = smul.addr %s13, 8
      %s17 = scalar_lea.hbm %s0, %s16
      %s18 = sshll.u32 %s17, 4
      %s19 = int_to_ptr.hbm [resolvable:$true] %s18
      %s20 = sshll.u32 [#allocation2], 4
      %s21 = int_to_ptr.vmem [resolvable:$true] %s20
      %26 = dma.hbm_to_vmem [thread:$0]  %s19, 256, %s21, [#allocation3], 128, 128, 8
    $region5: #{tpu_custom_call.1} parent=1 // pred_fallthru
      _
    // Predicated region
    $region6: #{tpu_custom_call.1} parent=1 // pred_check
      _
    $region7: #{tpu_custom_call.1} parent=1 // pred_check_branch
      %28 = sbr.rel (0) target = $region9
    $region8: #{tpu_custom_call.1} parent=1 // pred_region
      %s29 = sadd.s32 0, 0
      %s30 = smul.u32 2, %s29
      %32 = vsyncadd [#allocation6], 0
      %s33 = smul.addr %s30, 8
      %s34 = scalar_lea.hbm %s1, %s33
      %s35 = sshll.u32 %s34, 4
      %s36 = int_to_ptr.hbm [resolvable:$true] %s35
      %s37 = sshll.u32 [#allocation5], 4
      %s38 = int_to_ptr.vmem [resolvable:$true] %s37
      %43 = dma.hbm_to_vmem [thread:$0]  %s36, 256, %s38, [#allocation6], 128, 128, 8
    $region9: #{tpu_custom_call.1} parent=1 // pred_fallthru
      _
    // Predicated region
    $region10: #{tpu_custom_call.1} parent=1 // pred_check
      _
    $region11: #{tpu_custom_call.1} parent=1 // pred_check_branch
      %45 = sbr.rel (0) target = $region13
    $region12: #{tpu_custom_call.1} parent=1 // pred_region
      %47 = dma.done [#allocation3], 256
    $region13: #{tpu_custom_call.1} parent=1 // pred_fallthru
      _
    // Predicated region
    $region14: #{tpu_custom_call.1} parent=1 // pred_check
      _
    $region15: #{tpu_custom_call.1} parent=1 // pred_check_branch
      %49 = sbr.rel (0) target = $region17
    $region16: #{tpu_custom_call.1} parent=1 // pred_region
      %51 = dma.done [#allocation6], 256
    $region17: #{tpu_custom_call.1} parent=1 // pred_fallthru
      _
    %s52 = sadd.s32 0, 0
    %s53 = smul.u32 2, %s52
    %s54 = sadd.s32 0, 0
    %s55 = smul.u32 2, %s54
    %p56 = scmp.eq.s32.totalorder 0, 0
    // Predicated region
    $region18: #{tpu_custom_call.1} parent=1 // pred_check
      %p57 = pneg %p56
    $region19: #{tpu_custom_call.1} parent=1 // pred_check_branch
      %59 = sbr.rel (%p57) target = $region21
    $region20: #{tpu_custom_call.1} parent=1 // pred_region
      %60 = vst [vmem:[#allocation7] sm:$0xff] 0.0
    $region21: #{tpu_custom_call.1} parent=1 // pred_fallthru
      _
    %v61 = vld [vmem:[#allocation2] sm:$0xff]
    %v62 = vld [vmem:[#allocation2 + $0x8] sm:$0xff]
    %v63 = vld [vmem:[#allocation5] sm:$0xff]
    %v64 = vld [vmem:[#allocation5 + $0x8] sm:$0xff]
    %v65 = vsub.f32 %v61, %v63
    %v66 = vsub.f32 %v62, %v64
    %v67 = vmul.f32 %v65, %v65
    %v68 = vmul.f32 %v66, %v66
    %s69 = sadd.s32 0, 0
    %s70 = smul.u32 %s69, 16
    %v71 = vlaneseq
    %v72 = vshrl.u32 %v71, 7
    %v73 = vadd.s32 %v72, 8
    %v74 = vstv %s70
    %v75 = vadd.s32 %v74, %v72
    %v76 = vadd.s32 %v74, %v73
    %vm77 = vcmp.lt.s32.totalorder %v75, 16
    %vm78 = vcmp.lt.s32.totalorder %v76, 16
    %v79 = vsel %vm77, %v67, 0.0
    %v80 = vsel %vm78, %v68, 0.0
    %v81 = vadd.f32 %v79, %v80
    %v82 = vld [vmem:[#allocation7] sm:$0xff]
    %v83 = vadd.f32 %v82, %v81
    %84 = vst [vmem:[#allocation7] sm:$0xff] %v83
    // Predicated region
    $region22: #{tpu_custom_call.1} parent=1 // pred_check
      _
    $region23: #{tpu_custom_call.1} parent=1 // pred_check_branch
      %86 = sbr.rel (0) target = $region25
    $region24: #{tpu_custom_call.1} parent=1 // pred_region
      %88 = vsyncadd [#allocation4], 0
      %s90 = sshll.u32 [#allocation7], 4
      %s91 = int_to_ptr.vmem [resolvable:$true] %s90
      %s92 = sshll.u32 %s2, 4
      %s93 = int_to_ptr.hbm [resolvable:$true] %s92
      %95 = dma.vmem_to_hbm [thread:$0]  %s91, 128, %s93, [#allocation4]
    $region25: #{tpu_custom_call.1} parent=1 // pred_fallthru
      _
    // Predicated region
    $region26: #{tpu_custom_call.1} parent=1 // pred_check
      _
    $region27: #{tpu_custom_call.1} parent=1 // pred_check_branch
      %97 = sbr.rel (0) target = $region29
    $region28: #{tpu_custom_call.1} parent=1 // pred_region
      %99 = dma.done [#allocation4], 128
    $region29: #{tpu_custom_call.1} parent=1 // pred_fallthru
      _
    %100 = vsyncpa [#allocation3], 1
    %101 = vsyncpa [#allocation6], 1
    %102 = vsyncpa [#allocation4], 1

</llo_original>
